<compile_context>
chip_gen: v7x
topology: tpu7x:2x2x1
jax: 0.10.0
libtpu: 0.0.40
codegen_flags: <defaults>
</compile_context>

<pallas_src>
import jax
import jax.numpy as jnp
from jax import lax
from jax.experimental import pallas as pl
from jax.experimental.pallas import tpu as pltpu

# ---------------- small synthetic configuration ----------------
B = 2
C_IN = 3          # x.shape[1] == 3 -> the latent_avg branch of pSp.forward
H = W = 16
KH = KW = 3
C_MID = 8         # encoder conv channels
CAM_DIM = 25      # EG3D camera params are 25-dim (16 extrinsics + 9 intrinsics)
N_STYLES = 8      # synthetic (real EG3D pSp uses 14)
STYLE_DIM = 32    # synthetic (real is 512)
C0 = 8            # synthesis constant-feature channels
IMG_C = 3
HW = H * W
KKC = C_IN * KH * KW          # im2col feature dim
FEAT = C_MID + CAM_DIM
SD = N_STYLES * STYLE_DIM     # 256 -> lane-dense codes output
HEAD_CAM_ROW = 16             # bf16 sublane-tile aligned start of the cam rows


# ---------------- the single fused kernel ---------------------------------
def _make_psp_kernel(n_views: int, batch: int):
    def kernel(patch_ref, wconv_ref, pmat_ref, whead_ref, latb_ref,
               cams_ref, modt_ref, m_ref, bias_ref,
               codes_ref, img_ref):
        f32 = jnp.float32
        bf16 = jnp.bfloat16
        trans_b = (((1,), (1,)), ((), ()))   # A @ B^T dimension numbers

        # ---- encoder: lane-dense conv GEMM (bias folded via ones row) + ReLU
        y = jnp.dot(wconv_ref[...], patch_ref[...],
                    preferred_element_type=f32)                    # [C_MID, B*HW]
        y_bf = jnp.maximum(y, 0.0).astype(bf16)

        # per-sample global average pool: pmat [B, B*HW] (rows = 1/HW over the
        # sample span); transposed-RHS dot keeps y lane-dense and lands pooled
        # directly in [B, C_MID] (no in-kernel transpose).
        pooled = lax.dot_general(pmat_ref[...], y_bf, trans_b,
                                 preferred_element_type=f32)       # [B, C_MID]

        # ---- encoder head on [pooled | cam0]; b_head + latent pre-added on host
        cams = cams_ref[...]                                       # [V*B, CAM_DIM]
        codes = (jnp.dot(pooled.astype(bf16), whead_ref[0:C_MID, :],
                         preferred_element_type=f32)
                 + jnp.dot(cams[0:batch, :],
                           whead_ref[HEAD_CAM_ROW:HEAD_CAM_ROW + CAM_DIM, :],
                           preferred_element_type=f32)
                 + latb_ref[...])                                  # [B, SD]
        codes_ref[...] = codes

        # ---- synthesis: style pathway (style-avg @ w_mod folded on host,
        # stored lane-major), one cam GEMM for all views, one toRGB matrix M
        # (w_rgb/const folded on host) -> no style row-expansion needed.
        style_shared = lax.dot_general(codes.astype(bf16), modt_ref[:, 0:SD],
                                       trans_b,
                                       preferred_element_type=f32)  # [B, C0]
        style_cam = lax.dot_general(cams, modt_ref[:, SD:SD + CAM_DIM],
                                    trans_b,
                                    preferred_element_type=f32)     # [V*B, C0]
        rgb_shared = jnp.dot(style_shared.astype(bf16), m_ref[...],
                             preferred_element_type=f32)            # [B, IMG_C*HW]
        rgb_cam = jnp.dot(style_cam.astype(bf16), m_ref[...],
                          preferred_element_type=f32)               # [V*B, IMG_C*HW]

        bias = bias_ref[...]                                        # [1, IMG_C*HW]
        for v in range(n_views):                                    # static unroll
            img_ref[v * batch:(v + 1) * batch, :] = jnp.tanh(
                rgb_shared + rgb_cam[v * batch:(v + 1) * batch, :] + bias)

    return kernel


# ---------------- pSp forward (thin JAX wrapper) ---------------------------
def psp_forward(params, x, camera_params, novel_view_camera_params=None,
                latent=None):
    batch = x.shape[0]
    f32 = jnp.float32
    bf16 = jnp.bfloat16

    # im2col patches, feature-major [KKC, B*HW], plus a ones row so the conv
    # bias folds into the GEMM.
    patches = lax.conv_general_dilated_patches(
        x, filter_shape=(KH, KW), window_strides=(1, 1), padding='SAME',
        dimension_numbers=('NCHW', 'OIHW', 'NCHW'))                   # [B, KKC, H, W]
    patch_t = patches.reshape(batch, KKC, HW).transpose(1, 0, 2)
    patch_t = patch_t.reshape(KKC, batch * HW)
    patch_t = jnp.concatenate(
        [patch_t, jnp.ones((1, batch * HW), patch_t.dtype)], axis=0
    ).astype(bf16)                                                    # [KKC+1, B*HW]

    wconv = jnp.concatenate(
        [params['w_conv'].T, params['b_conv'].reshape(C_MID, 1)], axis=1
    ).astype(bf16)                                                    # [C_MID, KKC+1]

    # per-sample average-pool matrix (compile-time constant)
    pmat = (jnp.kron(jnp.eye(batch, dtype=f32),
                     jnp.ones((1, HW), f32)) / HW).astype(bf16)       # [B, B*HW]

    # cameras, view-major flat: rows [0:B] = main view, [B:2B] = novel view
    if novel_view_camera_params is not None:
        cams = jnp.concatenate([camera_params, novel_view_camera_params], axis=0)
        n_views = 2
    else:
        cams = camera_params
        n_views = 1
    cams = cams.astype(bf16)                                          # [V*B, CAM_DIM]

    # head weight, sublane-aligned pack: rows [0:C_MID] pooled part,
    # rows [16:16+CAM_DIM] camera part (16 = bf16 sublane tile).
    w_head = params['w_head']
    whead = jnp.concatenate(
        [w_head[:C_MID],
         jnp.zeros((HEAD_CAM_ROW - C_MID, SD), f32),
         w_head[C_MID:]], axis=0).astype(bf16)                        # [16+CAM_DIM, SD]

    # b_head + latent / latent_avg pre-added on host
    # TODO(synk): the x.shape[1]==6 (dual-image) encoder variant is not modeled;
    #             only the latent-selection logic of pSp.forward is kept.
    if x.shape[1] == 6 and latent is not None:
        lat_flat = latent.reshape(batch, SD)
    else:
        lat_flat = jnp.broadcast_to(params['latent_avg'].reshape(1, SD),
                                    (batch, SD))
    lat_bias = lat_flat + params['b_head']                            # [B, SD] f32

    # style pathway folds: (style-average @ w_mod) and w_cam, stored lane-major
    # as one [C0, SD+CAM_DIM] slab so the DMA is dense.
    style_pool = (jnp.tile(jnp.eye(STYLE_DIM, dtype=f32), (N_STYLES, 1))
                  / N_STYLES)                                         # [SD, STYLE_DIM]
    fused_mod = style_pool @ params['w_mod']                          # [SD, C0]
    mod_t = jnp.concatenate([fused_mod.T, params['w_cam'].T],
                            axis=1).astype(bf16)                      # [C0, SD+CAM_DIM]

    # toRGB fold: M[k, c*HW+hw] = w_rgb[c,k] * const[k,hw]; bias folds
    # b_mod @ M + b_rgb (broadcast over HW).
    m_rgb = jnp.einsum('ck,kh->kch', params['w_rgb'],
                       params['const']).reshape(C0, IMG_C * HW)       # [C0, IMG_C*HW]
    base_bias = (params['b_mod'] @ m_rgb
                 + jnp.repeat(params['b_rgb'].reshape(IMG_C), HW)[None, :])
    m_rgb = m_rgb.astype(bf16)

    vspec = pl.BlockSpec(memory_space=pltpu.MemorySpace.VMEM)
    codes_flat, img = pl.pallas_call(
        _make_psp_kernel(n_views, batch),
        in_specs=[vspec] * 9,
        out_specs=(vspec, vspec),
        out_shape=(jax.ShapeDtypeStruct((batch, SD), f32),
                   jax.ShapeDtypeStruct((n_views * batch, IMG_C * HW), f32)),
    )(patch_t, wconv, pmat, whead, lat_bias, cams, mod_t, m_rgb, base_bias)

    codes = codes_flat.reshape(batch, N_STYLES, STYLE_DIM)
    imgs = img.reshape(n_views, batch, IMG_C, H, W)
    y_hat = imgs[0]
    y_hat_novel = imgs[1] if novel_view_camera_params is not None else None
    return codes, y_hat, y_hat_novel


# ---------------- deterministic synthetic parameters -----------------------
def init_params(key):
    ks = jax.random.split(key, 8)
    s = 0.1
    return dict(
        w_conv=jax.random.normal(ks[0], (KKC, C_MID), jnp.float32) * s,
        b_conv=jnp.zeros((1, C_MID), jnp.float32),
        w_head=jax.random.normal(ks[1], (FEAT, SD), jnp.float32) * s,
        b_head=jnp.zeros((1, SD), jnp.float32),
        latent_avg=jax.random.normal(ks[2], (N_STYLES, STYLE_DIM), jnp.float32) * s,
        w_mod=jax.random.normal(ks[3], (STYLE_DIM, C0), jnp.float32) * s,
        w_cam=jax.random.normal(ks[4], (CAM_DIM, C0), jnp.float32) * s,
        b_mod=jnp.ones((1, C0), jnp.float32),
        const=jax.random.normal(ks[5], (C0, HW), jnp.float32) * s,
        w_rgb=jax.random.normal(ks[6], (IMG_C, C0), jnp.float32) * s,
        b_rgb=jnp.zeros((IMG_C, 1), jnp.float32),
    )


if __name__ == "__main__":
    key = jax.random.PRNGKey(0)
    kx, kc, kn, kp = jax.random.split(key, 4)
    x = jax.random.normal(kx, (B, C_IN, H, W), jnp.float32)
    camera_params = jax.random.normal(kc, (B, CAM_DIM), jnp.float32)
    novel_view_camera_params = jax.random.normal(kn, (B, CAM_DIM), jnp.float32)
    params = init_params(kp)

    forward = jax.jit(psp_forward)
    codes, y_hat, y_hat_novel = forward(
        params, x, camera_params, novel_view_camera_params)
    jax.block_until_ready((codes, y_hat, y_hat_novel))

    assert codes.shape == (B, N_STYLES, STYLE_DIM)
    assert y_hat.shape == (B, IMG_C, H, W)
    assert y_hat_novel.shape == (B, IMG_C, H, W)
    assert codes.dtype == jnp.float32 and y_hat.dtype == jnp.float32
    assert bool(jnp.all(jnp.isfinite(codes)))
    assert bool(jnp.all(jnp.isfinite(y_hat)))
    assert bool(jnp.all(jnp.isfinite(y_hat_novel)))
    print("KERNEL_OK")
</pallas_src>

<mosaic_0001>
module attributes {stable_mosaic.version = 11 : i64} {
  func.func @kernel(%arg0: memref<28x512xbf16, #tpu.memory_space<vmem>>, %arg1: memref<8x28xbf16, #tpu.memory_space<vmem>>, %arg2: memref<2x512xbf16, #tpu.memory_space<vmem>>, %arg3: memref<41x256xbf16, #tpu.memory_space<vmem>>, %arg4: memref<2x256xf32, #tpu.memory_space<vmem>>, %arg5: memref<4x25xbf16, #tpu.memory_space<vmem>>, %arg6: memref<8x281xbf16, #tpu.memory_space<vmem>>, %arg7: memref<8x768xbf16, #tpu.memory_space<vmem>>, %arg8: memref<1x768xf32, #tpu.memory_space<vmem>>, %arg9: memref<2x256xf32, #tpu.memory_space<vmem>>, %arg10: memref<4x768xf32, #tpu.memory_space<vmem>>) attributes {dimension_semantics = [], scalar_prefetch = 0 : i64, scratch_operands = 0 : i64, tpu.core_type = #tpu.core_type<tc>} {
    %c0 = arith.constant 0 : index
    %c0_0 = arith.constant 0 : index
    %0 = vector.load %arg1[%c0, %c0_0] : memref<8x28xbf16, #tpu.memory_space<vmem>>, vector<8x28xbf16>
    %c0_1 = arith.constant 0 : index
    %c0_2 = arith.constant 0 : index
    %1 = vector.load %arg0[%c0_1, %c0_2] : memref<28x512xbf16, #tpu.memory_space<vmem>>, vector<28x512xbf16>
    %cst = arith.constant dense<0.000000e+00> : vector<8x512xf32>
    %2 = tpu.matmul %0, %1, %cst {dimension_numbers = #tpu.dot_dimension_numbers<[1], [0], [0], [1], [0, 0, 1, 1], [], []>} : vector<8x28xbf16>, vector<28x512xbf16>, vector<8x512xf32> -> vector<8x512xf32>
    %cst_3 = arith.constant 0.000000e+00 : f32
    %3 = vector.broadcast %cst_3 : f32 to vector<8x512xf32>
    %4 = arith.maximumf %2, %3 : vector<8x512xf32>
    %5 = arith.truncf %4 : vector<8x512xf32> to vector<8x512xbf16>
    %c0_4 = arith.constant 0 : index
    %c0_5 = arith.constant 0 : index
    %6 = vector.load %arg2[%c0_4, %c0_5] : memref<2x512xbf16, #tpu.memory_space<vmem>>, vector<2x512xbf16>
    %cst_6 = arith.constant dense<0.000000e+00> : vector<2x8xf32>
    %7 = tpu.matmul %6, %5, %cst_6 {dimension_numbers = #tpu.dot_dimension_numbers<[1], [1], [0], [0], [0, 0, 1, 0], [], []>} : vector<2x512xbf16>, vector<8x512xbf16>, vector<2x8xf32> -> vector<2x8xf32>
    %c0_7 = arith.constant 0 : index
    %c0_8 = arith.constant 0 : index
    %8 = vector.load %arg5[%c0_7, %c0_8] : memref<4x25xbf16, #tpu.memory_space<vmem>>, vector<4x25xbf16>
    %9 = arith.truncf %7 : vector<2x8xf32> to vector<2x8xbf16>
    %c0_9 = arith.constant 0 : index
    %c0_10 = arith.constant 0 : index
    %10 = vector.load %arg3[%c0_9, %c0_10] : memref<41x256xbf16, #tpu.memory_space<vmem>>, vector<8x256xbf16>
    %cst_11 = arith.constant dense<0.000000e+00> : vector<2x256xf32>
    %11 = tpu.matmul %9, %10, %cst_11 {dimension_numbers = #tpu.dot_dimension_numbers<[1], [0], [0], [1], [0, 0, 1, 1], [], []>} : vector<2x8xbf16>, vector<8x256xbf16>, vector<2x256xf32> -> vector<2x256xf32>
    %12 = vector.extract_strided_slice %8 {offsets = [0, 0], sizes = [2, 25], strides = [1, 1]} : vector<4x25xbf16> to vector<2x25xbf16>
    %c16 = arith.constant 16 : index
    %c0_12 = arith.constant 0 : index
    %13 = vector.load %arg3[%c16, %c0_12] : memref<41x256xbf16, #tpu.memory_space<vmem>>, vector<25x256xbf16>
    %cst_13 = arith.constant dense<0.000000e+00> : vector<2x256xf32>
    %14 = tpu.matmul %12, %13, %cst_13 {dimension_numbers = #tpu.dot_dimension_numbers<[1], [0], [0], [1], [0, 0, 1, 1], [], []>} : vector<2x25xbf16>, vector<25x256xbf16>, vector<2x256xf32> -> vector<2x256xf32>
    %15 = arith.addf %11, %14 : vector<2x256xf32>
    %c0_14 = arith.constant 0 : index
    %c0_15 = arith.constant 0 : index
    %16 = vector.load %arg4[%c0_14, %c0_15] : memref<2x256xf32, #tpu.memory_space<vmem>>, vector<2x256xf32>
    %17 = arith.addf %15, %16 : vector<2x256xf32>
    %c0_16 = arith.constant 0 : index
    %c0_17 = arith.constant 0 : index
    %18 = vector.load %arg9[%c0_16, %c0_17] : memref<2x256xf32, #tpu.memory_space<vmem>>, vector<2x256xf32>
    tpu.vector_store %arg9[%c0_16, %c0_17], %17 {strides = array<i32>} : memref<2x256xf32, #tpu.memory_space<vmem>>, vector<2x256xf32>,
    %19 = arith.truncf %17 : vector<2x256xf32> to vector<2x256xbf16>
    %c0_18 = arith.constant 0 : index
    %c0_19 = arith.constant 0 : index
    %20 = vector.load %arg6[%c0_18, %c0_19] : memref<8x281xbf16, #tpu.memory_space<vmem>>, vector<8x256xbf16>
    %cst_20 = arith.constant dense<0.000000e+00> : vector<2x8xf32>
    %21 = tpu.matmul %19, %20, %cst_20 {dimension_numbers = #tpu.dot_dimension_numbers<[1], [1], [0], [0], [0, 0, 1, 0], [], []>} : vector<2x256xbf16>, vector<8x256xbf16>, vector<2x8xf32> -> vector<2x8xf32>
    %c0_21 = arith.constant 0 : index
    %c256 = arith.constant 256 : index
    %22 = vector.load %arg6[%c0_21, %c256] : memref<8x281xbf16, #tpu.memory_space<vmem>>, vector<8x25xbf16>
    %cst_22 = arith.constant dense<0.000000e+00> : vector<4x8xf32>
    %23 = tpu.matmul %8, %22, %cst_22 {dimension_numbers = #tpu.dot_dimension_numbers<[1], [1], [0], [0], [0, 0, 1, 0], [], []>} : vector<4x25xbf16>, vector<8x25xbf16>, vector<4x8xf32> -> vector<4x8xf32>
    %24 = arith.truncf %21 : vector<2x8xf32> to vector<2x8xbf16>
    %c0_23 = arith.constant 0 : index
    %c0_24 = arith.constant 0 : index
    %25 = vector.load %arg7[%c0_23, %c0_24] : memref<8x768xbf16, #tpu.memory_space<vmem>>, vector<8x768xbf16>
    %cst_25 = arith.constant dense<0.000000e+00> : vector<2x768xf32>
    %26 = tpu.matmul %24, %25, %cst_25 {dimension_numbers = #tpu.dot_dimension_numbers<[1], [0], [0], [1], [0, 0, 1, 1], [], []>} : vector<2x8xbf16>, vector<8x768xbf16>, vector<2x768xf32> -> vector<2x768xf32>
    %27 = arith.truncf %23 : vector<4x8xf32> to vector<4x8xbf16>
    %c0_26 = arith.constant 0 : index
    %c0_27 = arith.constant 0 : index
    %28 = vector.load %arg7[%c0_26, %c0_27] : memref<8x768xbf16, #tpu.memory_space<vmem>>, vector<8x768xbf16>
    %cst_28 = arith.constant dense<0.000000e+00> : vector<4x768xf32>
    %29 = tpu.matmul %27, %28, %cst_28 {dimension_numbers = #tpu.dot_dimension_numbers<[1], [0], [0], [1], [0, 0, 1, 1], [], []>} : vector<4x8xbf16>, vector<8x768xbf16>, vector<4x768xf32> -> vector<4x768xf32>
    %c0_29 = arith.constant 0 : index
    %c0_30 = arith.constant 0 : index
    %30 = vector.load %arg8[%c0_29, %c0_30] : memref<1x768xf32, #tpu.memory_space<vmem>>, vector<1x768xf32>
    %31 = vector.extract_strided_slice %29 {offsets = [0, 0], sizes = [2, 768], strides = [1, 1]} : vector<4x768xf32> to vector<2x768xf32>
    %32 = arith.addf %26, %31 : vector<2x768xf32>
    %33 = vector.broadcast %30 : vector<1x768xf32> to vector<2x768xf32>
    %34 = arith.addf %32, %33 : vector<2x768xf32>
    %35 = math.tanh %34 : vector<2x768xf32>
    %c0_31 = arith.constant 0 : index
    %c0_32 = arith.constant 0 : index
    %36 = vector.load %arg10[%c0_31, %c0_32] : memref<4x768xf32, #tpu.memory_space<vmem>>, vector<2x768xf32>
    tpu.vector_store %arg10[%c0_31, %c0_32], %35 {strides = array<i32>} : memref<4x768xf32, #tpu.memory_space<vmem>>, vector<2x768xf32>,
    %37 = vector.extract_strided_slice %29 {offsets = [2, 0], sizes = [2, 768], strides = [1, 1]} : vector<4x768xf32> to vector<2x768xf32>
    %38 = arith.addf %26, %37 : vector<2x768xf32>
    %39 = vector.broadcast %30 : vector<1x768xf32> to vector<2x768xf32>
    %40 = arith.addf %38, %39 : vector<2x768xf32>
    %41 = math.tanh %40 : vector<2x768xf32>
    %c2 = arith.constant 2 : index
    %c0_33 = arith.constant 0 : index
    %42 = vector.load %arg10[%c2, %c0_33] : memref<4x768xf32, #tpu.memory_space<vmem>>, vector<2x768xf32>
    tpu.vector_store %arg10[%c2, %c0_33], %41 {strides = array<i32>} : memref<4x768xf32, #tpu.memory_space<vmem>>, vector<2x768xf32>,
    return
  }
}

</mosaic_0001>

<llo_original>
// kernel: squeeze.2
$region0: #{squeeze.2}
  %s0 = inlined_call_operand.vmem [shape: f32[2,768], index: 0, kind: input, shape index: {}]
  %s1 = inlined_call_operand.hbm [shape: f32[2,3,16,16], index: 1, kind: output, shape index: {}]
  $region1: #{squeeze.2} parent=0
    #allocation0 [shape = 'u8[49152]{0}', space=vmem, size = 0xc000, scoped, tag = 'operand span for operand 1']
    #allocation1 [shape = 's32[1]{0}', space=sflag, size = 0x4, scoped, tag = 'scoped memory for squeeze.2']
    #allocation2 [shape = 'u8[24576]{0}', space=vmem, size = 0x6000, scoped, tag = 'scoped mem for input reshape']
    %2 = vsyncpa [#allocation1], 0
    %s4 = sshllo.u32 0, 2
    %s5 = smul.addr 2, 5
    %s6 = scalar_lea.vmem %s0, %s5
    %v7 = vld [vmem:[%s6] sm:%s4]
    %s8 = scalar_lea.vmem [#allocation2], 40
    %9 = vst [vmem:[%s8] sm:%s4] %v7
    %s10 = smul.addr 2, 4
    %s11 = scalar_lea.vmem %s0, %s10
    %v12 = vld [vmem:[%s11] sm:%s4]
    %s13 = scalar_lea.vmem [#allocation2], 32
    %14 = vst [vmem:[%s13] sm:%s4] %v12
    %s15 = smul.addr 2, 3
    %s16 = scalar_lea.vmem %s0, %s15
    %v17 = vld [vmem:[%s16] sm:%s4]
    %s18 = scalar_lea.vmem [#allocation2], 24
    %19 = vst [vmem:[%s18] sm:%s4] %v17
    %s20 = smul.addr 2, 2
    %s21 = scalar_lea.vmem %s0, %s20
    %v22 = vld [vmem:[%s21] sm:%s4]
    %s23 = scalar_lea.vmem [#allocation2], 16
    %24 = vst [vmem:[%s23] sm:%s4] %v22
    %s25 = scalar_lea.vmem %s0, 2
    %v26 = vld [vmem:[%s25] sm:%s4]
    %s27 = scalar_lea.vmem [#allocation2], 8
    %28 = vst [vmem:[%s27] sm:%s4] %v26
    %v29 = vld [vmem:[%s0] sm:%s4]
    %30 = vst [vmem:[#allocation2] sm:%s4] %v29
    %v31 = vld [vmem:[#allocation2] sm:$0x3]
    %vm32 = vcmask 130048
    %33 = vst.msk [vmem:[#allocation0] ss:$48 sm:$0x3] %vm32, %v31
    %s34 = scalar_lea.vmem [#allocation2], 8
    %v35 = vld [vmem:[%s34] sm:$0x3]
    %vm36 = vcmask 130048
    %s37 = scalar_lea.vmem [#allocation0], 8
    %38 = vst.msk [vmem:[%s37] ss:$48 sm:$0x3] %vm36, %v35
    %s39 = scalar_lea.vmem [#allocation2], 16
    %v40 = vld [vmem:[%s39] sm:$0x3]
    %vm41 = vcmask 130048
    %s42 = scalar_lea.vmem [#allocation0], 16
    %43 = vst.msk [vmem:[%s42] ss:$48 sm:$0x3] %vm41, %v40
    %s44 = scalar_lea.vmem [#allocation2], 24
    %v45 = vld [vmem:[%s44] sm:$0x3]
    %vm46 = vcmask 130048
    %s47 = scalar_lea.vmem [#allocation0], 24
    %48 = vst.msk [vmem:[%s47] ss:$48 sm:$0x3] %vm46, %v45
    %s49 = scalar_lea.vmem [#allocation2], 32
    %v50 = vld [vmem:[%s49] sm:$0x3]
    %vm51 = vcmask 130048
    %s52 = scalar_lea.vmem [#allocation0], 32
    %53 = vst.msk [vmem:[%s52] ss:$48 sm:$0x3] %vm51, %v50
    %s54 = scalar_lea.vmem [#allocation2], 40
    %v55 = vld [vmem:[%s54] sm:$0x3]
    %vm56 = vcmask 130048
    %s57 = scalar_lea.vmem [#allocation0], 40
    %58 = vst.msk [vmem:[%s57] ss:$48 sm:$0x3] %vm56, %v55
    %v59 = vld.sshfl [vmem:[#allocation2] sm:$0xff pattern:$0x99999180]
    %s60 = scalar_lea.vmem [#allocation2], 16
    %v61 = vld.sshfl [vmem:[%s60] sm:$0xff pattern:$0x80911111]
    %vm62 = vcmask 1047556
    %v63 = vsel %vm62, %v61, %v59
    %64 = vrot.lane.b32.xlu0 %v63, 112
    %v65 = vpop.permute.xlu0 %64
    %vm66 = vcmask 130048
    %s67 = scalar_lea.vmem [#allocation0], 1
    %68 = vst.msk [vmem:[%s67] ss:$8 sm:$0x3] %vm66, %v65
    %s69 = scalar_lea.vmem [#allocation0], 33
    %70 = vst.msk [vmem:[%s69] ss:$8 sm:$0x3c] %vm66, %v65
    %s71 = scalar_lea.vmem [#allocation0], 4294967265
    %72 = vst.msk [vmem:[%s71] ss:$8 sm:$0xc0] %vm66, %v65
    %s73 = scalar_lea.vmem [#allocation2], 32
    %v74 = vld.sshfl [vmem:[%s73] sm:$0xff pattern:$0x99999180]
    %75 = vrot.lane.b32.xlu0 %v74, 112
    %v76 = vpop.permute.xlu0 %75
    %vm77 = vcmask 130048
    %s78 = scalar_lea.vmem [#allocation0], 33
    %79 = vst.msk [vmem:[%s78] ss:$8 sm:$0x3] %vm77, %v76
    %s80 = scalar_lea.vmem [#allocation0], 65
    %81 = vst.msk [vmem:[%s80] ss:$8 sm:$0xc] %vm77, %v76
    %v82 = vld.sshfl [vmem:[#allocation2] sm:$0xff pattern:$0x99999180]
    %s83 = scalar_lea.vmem [#allocation2], 16
    %v84 = vld.sshfl [vmem:[%s83] sm:$0xff pattern:$0x80911111]
    %vm85 = vcmask 1047556
    %v86 = vsel %vm85, %v84, %v82
    %87 = vrot.lane.b32.xlu0 %v86, 96
    %v88 = vpop.permute.xlu0 %87
    %vm89 = vcmask 130048
    %s90 = scalar_lea.vmem [#allocation0], 2
    %91 = vst.msk [vmem:[%s90] ss:$8 sm:$0x3] %vm89, %v88
    %s92 = scalar_lea.vmem [#allocation0], 34
    %93 = vst.msk [vmem:[%s92] ss:$8 sm:$0x3c] %vm89, %v88
    %s94 = scalar_lea.vmem [#allocation0], 4294967266
    %95 = vst.msk [vmem:[%s94] ss:$8 sm:$0xc0] %vm89, %v88
    %s96 = scalar_lea.vmem [#allocation2], 32
    %v97 = vld.sshfl [vmem:[%s96] sm:$0xff pattern:$0x99999180]
    %98 = vrot.lane.b32.xlu0 %v97, 96
    %v99 = vpop.permute.xlu0 %98
    %vm100 = vcmask 130048
    %s101 = scalar_lea.vmem [#allocation0], 34
    %102 = vst.msk [vmem:[%s101] ss:$8 sm:$0x3] %vm100, %v99
    %s103 = scalar_lea.vmem [#allocation0], 66
    %104 = vst.msk [vmem:[%s103] ss:$8 sm:$0xc] %vm100, %v99
    %v105 = vld.sshfl [vmem:[#allocation2] sm:$0xff pattern:$0x99999180]
    %s106 = scalar_lea.vmem [#allocation2], 16
    %v107 = vld.sshfl [vmem:[%s106] sm:$0xff pattern:$0x80911111]
    %vm108 = vcmask 1047556
    %v109 = vsel %vm108, %v107, %v105
    %110 = vrot.lane.b32.xlu0 %v109, 80
    %v111 = vpop.permute.xlu0 %110
    %vm112 = vcmask 130048
    %s113 = scalar_lea.vmem [#allocation0], 3
    %114 = vst.msk [vmem:[%s113] ss:$8 sm:$0x3] %vm112, %v111
    %s115 = scalar_lea.vmem [#allocation0], 35
    %116 = vst.msk [vmem:[%s115] ss:$8 sm:$0x3c] %vm112, %v111
    %s117 = scalar_lea.vmem [#allocation0], 4294967267
    %118 = vst.msk [vmem:[%s117] ss:$8 sm:$0xc0] %vm112, %v111
    %s119 = scalar_lea.vmem [#allocation2], 32
    %v120 = vld.sshfl [vmem:[%s119] sm:$0xff pattern:$0x99999180]
    %121 = vrot.lane.b32.xlu0 %v120, 80
    %v122 = vpop.permute.xlu0 %121
    %vm123 = vcmask 130048
    %s124 = scalar_lea.vmem [#allocation0], 35
    %125 = vst.msk [vmem:[%s124] ss:$8 sm:$0x3] %vm123, %v122
    %s126 = scalar_lea.vmem [#allocation0], 67
    %127 = vst.msk [vmem:[%s126] ss:$8 sm:$0xc] %vm123, %v122
    %v128 = vld.sshfl [vmem:[#allocation2] sm:$0xff pattern:$0x99999180]
    %s129 = scalar_lea.vmem [#allocation2], 16
    %v130 = vld.sshfl [vmem:[%s129] sm:$0xff pattern:$0x80911111]
    %vm131 = vcmask 1047556
    %v132 = vsel %vm131, %v130, %v128
    %133 = vrot.lane.b32.xlu0 %v132, 64
    %v134 = vpop.permute.xlu0 %133
    %vm135 = vcmask 130048
    %s136 = scalar_lea.vmem [#allocation0], 4
    %137 = vst.msk [vmem:[%s136] ss:$8 sm:$0x3] %vm135, %v134
    %s138 = scalar_lea.vmem [#allocation0], 36
    %139 = vst.msk [vmem:[%s138] ss:$8 sm:$0x3c] %vm135, %v134
    %s140 = scalar_lea.vmem [#allocation0], 4294967268
    %141 = vst.msk [vmem:[%s140] ss:$8 sm:$0xc0] %vm135, %v134
    %s142 = scalar_lea.vmem [#allocation2], 32
    %v143 = vld.sshfl [vmem:[%s142] sm:$0xff pattern:$0x99999180]
    %144 = vrot.lane.b32.xlu0 %v143, 64
    %v145 = vpop.permute.xlu0 %144
    %vm146 = vcmask 130048
    %s147 = scalar_lea.vmem [#allocation0], 36
    %148 = vst.msk [vmem:[%s147] ss:$8 sm:$0x3] %vm146, %v145
    %s149 = scalar_lea.vmem [#allocation0], 68
    %150 = vst.msk [vmem:[%s149] ss:$8 sm:$0xc] %vm146, %v145
    %v151 = vld.sshfl [vmem:[#allocation2] sm:$0xff pattern:$0x99999180]
    %s152 = scalar_lea.vmem [#allocation2], 16
    %v153 = vld.sshfl [vmem:[%s152] sm:$0xff pattern:$0x80911111]
    %vm154 = vcmask 1047556
    %v155 = vsel %vm154, %v153, %v151
    %156 = vrot.lane.b32.xlu0 %v155, 48
    %v157 = vpop.permute.xlu0 %156
    %vm158 = vcmask 130048
    %s159 = scalar_lea.vmem [#allocation0], 5
    %160 = vst.msk [vmem:[%s159] ss:$8 sm:$0x3] %vm158, %v157
    %s161 = scalar_lea.vmem [#allocation0], 37
    %162 = vst.msk [vmem:[%s161] ss:$8 sm:$0x3c] %vm158, %v157
    %s163 = scalar_lea.vmem [#allocation0], 4294967269
    %164 = vst.msk [vmem:[%s163] ss:$8 sm:$0xc0] %vm158, %v157
    %s165 = scalar_lea.vmem [#allocation2], 32
    %v166 = vld.sshfl [vmem:[%s165] sm:$0xff pattern:$0x99999180]
    %167 = vrot.lane.b32.xlu0 %v166, 48
    %v168 = vpop.permute.xlu0 %167
    %vm169 = vcmask 130048
    %s170 = scalar_lea.vmem [#allocation0], 37
    %171 = vst.msk [vmem:[%s170] ss:$8 sm:$0x3] %vm169, %v168
    %s172 = scalar_lea.vmem [#allocation0], 69
    %173 = vst.msk [vmem:[%s172] ss:$8 sm:$0xc] %vm169, %v168
    %v174 = vld.sshfl [vmem:[#allocation2] sm:$0xff pattern:$0x99999180]
    %s175 = scalar_lea.vmem [#allocation2], 16
    %v176 = vld.sshfl [vmem:[%s175] sm:$0xff pattern:$0x80911111]
    %vm177 = vcmask 1047556
    %v178 = vsel %vm177, %v176, %v174
    %179 = vrot.lane.b32.xlu0 %v178, 32
    %v180 = vpop.permute.xlu0 %179
    %vm181 = vcmask 130048
    %s182 = scalar_lea.vmem [#allocation0], 6
    %183 = vst.msk [vmem:[%s182] ss:$8 sm:$0x3] %vm181, %v180
    %s184 = scalar_lea.vmem [#allocation0], 38
    %185 = vst.msk [vmem:[%s184] ss:$8 sm:$0x3c] %vm181, %v180
    %s186 = scalar_lea.vmem [#allocation0], 4294967270
    %187 = vst.msk [vmem:[%s186] ss:$8 sm:$0xc0] %vm181, %v180
    %s188 = scalar_lea.vmem [#allocation2], 32
    %v189 = vld.sshfl [vmem:[%s188] sm:$0xff pattern:$0x99999180]
    %190 = vrot.lane.b32.xlu0 %v189, 32
    %v191 = vpop.permute.xlu0 %190
    %vm192 = vcmask 130048
    %s193 = scalar_lea.vmem [#allocation0], 38
    %194 = vst.msk [vmem:[%s193] ss:$8 sm:$0x3] %vm192, %v191
    %s195 = scalar_lea.vmem [#allocation0], 70
    %196 = vst.msk [vmem:[%s195] ss:$8 sm:$0xc] %vm192, %v191
    %v197 = vld.sshfl [vmem:[#allocation2] sm:$0xff pattern:$0x99999180]
    %s198 = scalar_lea.vmem [#allocation2], 16
    %v199 = vld.sshfl [vmem:[%s198] sm:$0xff pattern:$0x80911111]
    %vm200 = vcmask 1047556
    %v201 = vsel %vm200, %v199, %v197
    %202 = vrot.lane.b32.xlu0 %v201, 16
    %v203 = vpop.permute.xlu0 %202
    %vm204 = vcmask 130048
    %s205 = scalar_lea.vmem [#allocation0], 7
    %206 = vst.msk [vmem:[%s205] ss:$8 sm:$0x3] %vm204, %v203
    %s207 = scalar_lea.vmem [#allocation0], 39
    %208 = vst.msk [vmem:[%s207] ss:$8 sm:$0x3c] %vm204, %v203
    %s209 = scalar_lea.vmem [#allocation0], 4294967271
    %210 = vst.msk [vmem:[%s209] ss:$8 sm:$0xc0] %vm204, %v203
    %s211 = scalar_lea.vmem [#allocation2], 32
    %v212 = vld.sshfl [vmem:[%s211] sm:$0xff pattern:$0x99999180]
    %213 = vrot.lane.b32.xlu0 %v212, 16
    %v214 = vpop.permute.xlu0 %213
    %vm215 = vcmask 130048
    %s216 = scalar_lea.vmem [#allocation0], 39
    %217 = vst.msk [vmem:[%s216] ss:$8 sm:$0x3] %vm215, %v214
    %s218 = scalar_lea.vmem [#allocation0], 71
    %219 = vst.msk [vmem:[%s218] ss:$8 sm:$0xc] %vm215, %v214
    %s221 = ssub.s32 1536, 1536
    %222 = vsyncadd [#allocation1], %s221
    %s224 = sshll.u32 [#allocation0], 4
    %s225 = int_to_ptr.vmem [resolvable:$true] %s224
    %227 = dma.vmem_to_hbm [thread:$0]  %s225, 1536, %s1, [#allocation1]
    %228 = dma.done [#allocation1], 1536
    %229 = vsyncpa [#allocation1], 1

// kernel: psp_forward.1
$region0: #{psp_forward.1}
  #allocation0 [shape = 'u32[]', space=smem, size = 0x4, offset = 0x4, fixed_abs, tag = 'smem constant byte address 0x4 - core index']
  #allocation1 [shape = 'u32[144,128]{1,0:T(1,128)}', space=vmem, size = 0x12000, scoped, tag = 'internal scratch']
  %s0 = inlined_call_operand.vmem [shape: bf16[28,512], index: 0, kind: input, shape index: {}]
  %s1 = inlined_call_operand.vmem [shape: bf16[8,28], index: 1, kind: input, shape index: {}]
  %s2 = inlined_call_operand.vmem [shape: bf16[2,512], index: 2, kind: input, shape index: {}]
  %s3 = inlined_call_operand.vmem [shape: bf16[41,256], index: 3, kind: input, shape index: {}]
  %s4 = inlined_call_operand.vmem [shape: f32[2,256], index: 4, kind: input, shape index: {}]
  %s5 = inlined_call_operand.vmem [shape: bf16[4,25], index: 5, kind: input, shape index: {}]
  %s6 = inlined_call_operand.vmem [shape: bf16[8,281], index: 6, kind: input, shape index: {}]
  %s7 = inlined_call_operand.vmem [shape: bf16[8,768], index: 7, kind: input, shape index: {}]
  %s8 = inlined_call_operand.vmem [shape: f32[1,768], index: 8, kind: input, shape index: {}]
  %s9 = inlined_call_operand.vmem [shape: f32[2,256], index: 9, kind: output, shape index: {0}]
  %s10 = inlined_call_operand.vmem [shape: f32[4,768], index: 10, kind: output, shape index: {1}]
  %11 = xla_tuple %s9, %s10
  %s12 = sld [smem:[#allocation0]]
  $region54: #{psp_forward.1} parent=0
    _
  %s14 = ssub.s32 1, %s12
  %s15 = scalar_select 0, %s14, %s12
  // Predicated region
  $region2: #{psp_forward.1} parent=0 // pred_check
    _
  $region3: #{psp_forward.1} parent=0 // pred_check_branch
    %17 = sbr.rel (0) target = $region5
  $region4: #{psp_forward.1} parent=0 // pred_region
    _
  $region5: #{psp_forward.1} parent=0 // pred_fallthru
    _
  // Predicated region
  $region6: #{psp_forward.1} parent=0 // pred_check
    _
  $region7: #{psp_forward.1} parent=0 // pred_check_branch
    %19 = sbr.rel (0) target = $region9
  $region8: #{psp_forward.1} parent=0 // pred_region
    _
  $region9: #{psp_forward.1} parent=0 // pred_fallthru
    _
  // Predicated region
  $region10: #{psp_forward.1} parent=0 // pred_check
    _
  $region11: #{psp_forward.1} parent=0 // pred_check_branch
    %21 = sbr.rel (0) target = $region13
  $region12: #{psp_forward.1} parent=0 // pred_region
    _
  $region13: #{psp_forward.1} parent=0 // pred_fallthru
    _
  // Predicated region
  $region14: #{psp_forward.1} parent=0 // pred_check
    _
  $region15: #{psp_forward.1} parent=0 // pred_check_branch
    %23 = sbr.rel (0) target = $region17
  $region16: #{psp_forward.1} parent=0 // pred_region
    _
  $region17: #{psp_forward.1} parent=0 // pred_fallthru
    _
  // Predicated region
  $region18: #{psp_forward.1} parent=0 // pred_check
    _
  $region19: #{psp_forward.1} parent=0 // pred_check_branch
    %25 = sbr.rel (0) target = $region21
  $region20: #{psp_forward.1} parent=0 // pred_region
    _
  $region21: #{psp_forward.1} parent=0 // pred_fallthru
    _
  // Predicated region
  $region22: #{psp_forward.1} parent=0 // pred_check
    _
  $region23: #{psp_forward.1} parent=0 // pred_check_branch
    %27 = sbr.rel (0) target = $region25
  $region24: #{psp_forward.1} parent=0 // pred_region
    _
  $region25: #{psp_forward.1} parent=0 // pred_fallthru
    _
  // Predicated region
  $region26: #{psp_forward.1} parent=0 // pred_check
    _
  $region27: #{psp_forward.1} parent=0 // pred_check_branch
    %29 = sbr.rel (0) target = $region29
  $region28: #{psp_forward.1} parent=0 // pred_region
    _
  $region29: #{psp_forward.1} parent=0 // pred_fallthru
    _
  // Predicated region
  $region30: #{psp_forward.1} parent=0 // pred_check
    _
  $region31: #{psp_forward.1} parent=0 // pred_check_branch
    %31 = sbr.rel (0) target = $region33
  $region32: #{psp_forward.1} parent=0 // pred_region
    _
  $region33: #{psp_forward.1} parent=0 // pred_fallthru
    _
  // Predicated region
  $region34: #{psp_forward.1} parent=0 // pred_check
    _
  $region35: #{psp_forward.1} parent=0 // pred_check_branch
    %33 = sbr.rel (0) target = $region37
  $region36: #{psp_forward.1} parent=0 // pred_region
    _
  $region37: #{psp_forward.1} parent=0 // pred_fallthru
    _
  %v35 = vld [vmem:[%s1] sm:$0xf]
  %v36 = vld [vmem:[%s0] sm:$0xff]
  %v37 = vld [vmem:[%s0 + $0x8] sm:$0xff]
  %v38 = vld [vmem:[%s0 + $0x10] sm:$0xff]
  %v39 = vld [vmem:[%s0 + $0x18] sm:$0xff]
  %v40 = vld [vmem:[%s0 + $0x20] sm:$0xff]
  %v41 = vld [vmem:[%s0 + $0x28] sm:$0xff]
  %v42 = vld [vmem:[%s0 + $0x30] sm:$0x33]
  %v43 = vld [vmem:[%s0 + $0x38] sm:$0x33]
  %v52 = vunpack.c.l.b16 %v36
  %v53 = vunpack.c.h.b16 %v36
  %v54 = vunpack.c.l.b16 %v37
  %v55 = vunpack.c.h.b16 %v37
  %v56 = vunpack.c.l.b16 %v38
  %v57 = vunpack.c.h.b16 %v38
  %v58 = vunpack.c.l.b16 %v39
  %v59 = vunpack.c.h.b16 %v39
  %v60 = vunpack.c.l.b16 %v40
  %v61 = vunpack.c.h.b16 %v40
  %v62 = vunpack.c.l.b16 %v41
  %v63 = vunpack.c.h.b16 %v41
  %v64 = vunpack.c.l.b16 %v42
  %v65 = vunpack.c.h.b16 %v42
  %v66 = vunpack.c.l.b16 %v43
  %v67 = vunpack.c.h.b16 %v43
  %v68 = vpack.c.b16 %v56, %v52
  %v69 = vpack.c.b16 %v57, %v53
  %v70 = vpack.c.b16 %v58, %v54
  %v71 = vpack.c.b16 %v59, %v55
  %v72 = vpack.c.b16 %v64, %v60
  %v73 = vpack.c.b16 %v65, %v61
  %v74 = vpack.c.b16 %v66, %v62
  %v75 = vpack.c.b16 %v67, %v63
  %vm80 = vcmask 228352
  %v82 = vsel %vm80, %v35, 0
  %vm84 = vcmask 1045504
  %v86 = vsel %vm84, %v72, 0
  %v89 = vsel %vm84, %v73, 0
  %v92 = vsel %vm84, %v74, 0
  %v95 = vsel %vm84, %v75, 0
  %97 = vmatprep.subr.bf16.mxu0 %v69
  %98 = vmatpush1.bf16.msra.mxu0 %v68
  %99 = vmatprep.subr.bf16.mxu0 %v89
  %100 = vmatpush1.bf16.msra.mxu0 %v86
  %101 = vmatprep.subr.bf16.mxu0 0
  %102 = vmatpush1.bf16.msra.mxu0 0
  %103 = vmatprep.subr.bf16.mxu0 0
  %104 = vmatpush1.bf16.msra.mxu0 0
  %105 = vmatprep.subr.bf16.mxu0 0
  %106 = vmatpush1.bf16.msra.mxu0 0
  %107 = vmatprep.subr.bf16.mxu0 0
  %108 = vmatpush1.bf16.msra.mxu0 0
  %109 = vmatprep.subr.bf16.mxu0 0
  %110 = vmatpush1.bf16.msra.mxu0 0
  %111 = vmatprep.subr.bf16.mxu0 0
  %112 = vmatpush1.bf16.msra.mxu0 0
  %113 = vmatprep.subr.bf16.mxu0 0
  %114 = vmatpush1.bf16.msra.mxu0 0
  %115 = vmatprep.subr.bf16.mxu0 0
  %116 = vmatpush1.bf16.msra.mxu0 0
  %117 = vmatprep.subr.bf16.mxu0 0
  %118 = vmatpush1.bf16.msra.mxu0 0
  %119 = vmatprep.subr.bf16.mxu0 0
  %120 = vmatpush1.bf16.msra.mxu0 0
  %121 = vmatprep.subr.bf16.mxu0 0
  %122 = vmatpush1.bf16.msra.mxu0 0
  %123 = vmatprep.subr.bf16.mxu0 0
  %124 = vmatpush1.bf16.msra.mxu0 0
  %125 = vmatprep.subr.bf16.mxu0 0
  %126 = vmatpush1.bf16.msra.mxu0 0
  %127 = vmatprep.subr.bf16.mxu0 0
  %128 = vmatpush1.bf16.msra.mxu0 0
  %129 = vmatprep.mubr.bf16.mxu0 0
  %130 = vmatmul.mubr.bf16.gmra.mrb[0].mxu0 %v82
  %v131 = vpop.f32.mrb[0].mxu0
  %v132 = vadd.f32 0.0, %v131
  %v133 = vpop.f32.mrb[0].mxu0
  %v134 = vadd.f32 0.0, %v133
  %v135 = vpop.f32.mrb[0].mxu0
  %v136 = vpop.f32.mrb[0].mxu0
  %137 = vdwg.mxu0
  %138 = vmatprep.subr.bf16.mxu0 %v71
  %139 = vmatpush1.bf16.msra.mxu0 %v70
  %140 = vmatprep.subr.bf16.mxu0 %v95
  %141 = vmatpush1.bf16.msra.mxu0 %v92
  %142 = vmatprep.subr.bf16.mxu0 0
  %143 = vmatpush1.bf16.msra.mxu0 0
  %144 = vmatprep.subr.bf16.mxu0 0
  %145 = vmatpush1.bf16.msra.mxu0 0
  %146 = vmatprep.subr.bf16.mxu0 0
  %147 = vmatpush1.bf16.msra.mxu0 0
  %148 = vmatprep.subr.bf16.mxu0 0
  %149 = vmatpush1.bf16.msra.mxu0 0
  %150 = vmatprep.subr.bf16.mxu0 0
  %151 = vmatpush1.bf16.msra.mxu0 0
  %152 = vmatprep.subr.bf16.mxu0 0
  %153 = vmatpush1.bf16.msra.mxu0 0
  %154 = vmatprep.subr.bf16.mxu0 0
  %155 = vmatpush1.bf16.msra.mxu0 0
  %156 = vmatprep.subr.bf16.mxu0 0
  %157 = vmatpush1.bf16.msra.mxu0 0
  %158 = vmatprep.subr.bf16.mxu0 0
  %159 = vmatpush1.bf16.msra.mxu0 0
  %160 = vmatprep.subr.bf16.mxu0 0
  %161 = vmatpush1.bf16.msra.mxu0 0
  %162 = vmatprep.subr.bf16.mxu0 0
  %163 = vmatpush1.bf16.msra.mxu0 0
  %164 = vmatprep.subr.bf16.mxu0 0
  %165 = vmatpush1.bf16.msra.mxu0 0
  %166 = vmatprep.subr.bf16.mxu0 0
  %167 = vmatpush1.bf16.msra.mxu0 0
  %168 = vmatprep.subr.bf16.mxu0 0
  %169 = vmatpush1.bf16.msra.mxu0 0
  %170 = vmatprep.mubr.bf16.mxu0 0
  %171 = vmatmul.mubr.bf16.gmra.mrb[0].mxu0 %v82
  %v172 = vpop.f32.mrb[0].mxu0
  %v173 = vadd.f32 0.0, %v172
  %v174 = vpop.f32.mrb[0].mxu0
  %v175 = vadd.f32 0.0, %v174
  %v176 = vpop.f32.mrb[0].mxu0
  %v177 = vpop.f32.mrb[0].mxu0
  %178 = vdwg.mxu0
  %v179 = vmax.f32 %v132, 0.0
  %v180 = vmax.f32 %v134, 0.0
  %v181 = vmax.f32 %v173, 0.0
  %v182 = vmax.f32 %v175, 0.0
  %v183 = vpack.c.bf16 %v179, %v179
  %v184 = vpack.c.bf16 %v180, %v180
  %v185 = vpack.c.bf16 %v181, %v181
  %v186 = vpack.c.bf16 %v182, %v182
  %v187 = vld [vmem:[%s2] sm:$0xf]
  %v190 = vunpack.c.l.s4 1966171168
  %v191 = vunpack.c.0.s8 %v190
  %v192 = vlaneseq
  %v193 = vshrl.u32 %v192, 7
  %v194 = vsub.s32 %v191, %v193
  %v195 = vrot.slane %v187, %v194
  %v196 = vcombine.high %v195, %v195
  %v198 = vunpack.c.l.s4 1966171168
  %v199 = vunpack.c.0.s8 %v198
  %v200 = vlaneseq
  %v201 = vshrl.u32 %v200, 7
  %v202 = vsub.s32 %v199, %v201
  %v203 = vrot.slane %v195, %v202
  %v205 = vunpack.c.l.s4 1966171168
  %v206 = vunpack.c.0.s8 %v205
  %v207 = vlaneseq
  %v208 = vshrl.u32 %v207, 7
  %v209 = vsub.s32 %v206, %v208
  %v210 = vrot.slane %v196, %v209
  %v211 = vcombine.high %v203, %v203
  %v212 = vcombine.high %v210, %v210
  %217 = vmatprep.subr.bf16.mxu0 %v184
  %218 = vmatpush1.bf16.xpose.msra.mxu0 %v183
  %219 = vmatprep.subr.bf16.mxu0 0
  %220 = vmatpush1.bf16.xpose.msra.mxu0 0
  %221 = vmatprep.subr.bf16.mxu0 0
  %222 = vmatpush1.bf16.xpose.msra.mxu0 0
  %223 = vmatprep.subr.bf16.mxu0 0
  %224 = vmatpush1.bf16.xpose.msra.mxu0 0
  %225 = vmatprep.subr.bf16.mxu0 0
  %226 = vmatpush1.bf16.xpose.msra.mxu0 0
  %227 = vmatprep.subr.bf16.mxu0 0
  %228 = vmatpush1.bf16.xpose.msra.mxu0 0
  %229 = vmatprep.subr.bf16.mxu0 0
  %230 = vmatpush1.bf16.xpose.msra.mxu0 0
  %231 = vmatprep.subr.bf16.mxu0 0
  %232 = vmatpush1.bf16.xpose.msra.mxu0 0
  %233 = vmatprep.subr.bf16.mxu0 0
  %234 = vmatpush1.bf16.xpose.msra.mxu0 0
  %235 = vmatprep.subr.bf16.mxu0 0
  %236 = vmatpush1.bf16.xpose.msra.mxu0 0
  %237 = vmatprep.subr.bf16.mxu0 0
  %238 = vmatpush1.bf16.xpose.msra.mxu0 0
  %239 = vmatprep.subr.bf16.mxu0 0
  %240 = vmatpush1.bf16.xpose.msra.mxu0 0
  %241 = vmatprep.subr.bf16.mxu0 0
  %242 = vmatpush1.bf16.xpose.msra.mxu0 0
  %243 = vmatprep.subr.bf16.mxu0 0
  %244 = vmatpush1.bf16.xpose.msra.mxu0 0
  %245 = vmatprep.subr.bf16.mxu0 0
  %246 = vmatpush1.bf16.xpose.msra.mxu0 0
  %247 = vmatprep.subr.bf16.mxu0 0
  %248 = vmatpush1.bf16.xpose.msra.mxu0 0
  %249 = vmatprep.mubr.bf16.mxu0 %v210
  %250 = vmatmul.mubr.bf16.gmra.mrb[0].mxu0 %v203
  %v251 = vpop.f32.mrb[0].mxu0
  %v252 = vadd.f32 0.0, %v251
  %v253 = vpop.f32.mrb[0].mxu0
  %v254 = vpop.f32.mrb[0].mxu0
  %v255 = vpop.f32.mrb[0].mxu0
  %256 = vdwg.mxu0
  %257 = vmatprep.subr.bf16.mxu0 %v186
  %258 = vmatpush1.bf16.xpose.msra.mxu0 %v185
  %259 = vmatprep.subr.bf16.mxu0 0
  %260 = vmatpush1.bf16.xpose.msra.mxu0 0
  %261 = vmatprep.subr.bf16.mxu0 0
  %262 = vmatpush1.bf16.xpose.msra.mxu0 0
  %263 = vmatprep.subr.bf16.mxu0 0
  %264 = vmatpush1.bf16.xpose.msra.mxu0 0
  %265 = vmatprep.subr.bf16.mxu0 0
  %266 = vmatpush1.bf16.xpose.msra.mxu0 0
  %267 = vmatprep.subr.bf16.mxu0 0
  %268 = vmatpush1.bf16.xpose.msra.mxu0 0
  %269 = vmatprep.subr.bf16.mxu0 0
  %270 = vmatpush1.bf16.xpose.msra.mxu0 0
  %271 = vmatprep.subr.bf16.mxu0 0
  %272 = vmatpush1.bf16.xpose.msra.mxu0 0
  %273 = vmatprep.subr.bf16.mxu0 0
  %274 = vmatpush1.bf16.xpose.msra.mxu0 0
  %275 = vmatprep.subr.bf16.mxu0 0
  %276 = vmatpush1.bf16.xpose.msra.mxu0 0
  %277 = vmatprep.subr.bf16.mxu0 0
  %278 = vmatpush1.bf16.xpose.msra.mxu0 0
  %279 = vmatprep.subr.bf16.mxu0 0
  %280 = vmatpush1.bf16.xpose.msra.mxu0 0
  %281 = vmatprep.subr.bf16.mxu0 0
  %282 = vmatpush1.bf16.xpose.msra.mxu0 0
  %283 = vmatprep.subr.bf16.mxu0 0
  %284 = vmatpush1.bf16.xpose.msra.mxu0 0
  %285 = vmatprep.subr.bf16.mxu0 0
  %286 = vmatpush1.bf16.xpose.msra.mxu0 0
  %287 = vmatprep.subr.bf16.mxu0 0
  %288 = vmatpush1.bf16.xpose.msra.mxu0 0
  %289 = vmatprep.mubr.bf16.mxu0 %v212
  %290 = vmatmul.mubr.bf16.gmra.mrb[0].mxu0 %v211
  %v291 = vpop.f32.mrb[0].mxu0
  %v292 = vadd.f32 %v252, %v291
  %v293 = vpop.f32.mrb[0].mxu0
  %v294 = vpop.f32.mrb[0].mxu0
  %v295 = vpop.f32.mrb[0].mxu0
  %296 = vdwg.mxu0
  %v297 = vld [vmem:[%s5] sm:$0x3]
  %v298 = vpack.c.bf16 %v292, %v292
  %v299 = vld [vmem:[%s3] sm:$0xff]
  %v300 = vld [vmem:[%s3 + $0x10] sm:$0xff]
  %v301 = vld [vmem:[%s3 + $0x18] sm:$0xff]
  %v302 = vld [vmem:[%s3 + $0x20] sm:$0xff]
  %v303 = vld [vmem:[%s3 + $0x28] sm:$0x11]
  %v308 = vunpack.c.l.b16 %v300
  %v309 = vunpack.c.h.b16 %v300
  %v310 = vunpack.c.l.b16 %v301
  %v311 = vunpack.c.h.b16 %v301
  %v312 = vunpack.c.l.b16 %v302
  %v313 = vunpack.c.h.b16 %v302
  %v314 = vunpack.c.l.b16 %v303
  %v315 = vunpack.c.h.b16 %v303
  %v316 = vpack.c.b16 %v310, %v308
  %v317 = vpack.c.b16 %v311, %v309
  %v318 = vpack.c.b16 %v314, %v312
  %v319 = vpack.c.b16 %v315, %v313
  %vm322 = vcmask 203776
  %v324 = vsel %vm322, %v297, 0
  %vm326 = vcmask 1043456
  %vm327 = vcmask 1044480
  %v328 = vsel %vm326, 4294967295, 65535
  %v329 = vsel %vm327, %v328, 0
  %v331 = vand.u32 %v318, %v329
  %v334 = vand.u32 %v319, %v329
  %336 = vmatprep.subr.bf16.mxu0 %v317
  %337 = vmatpush1.bf16.msra.mxu0 %v316
  %338 = vmatprep.subr.bf16.mxu0 %v334
  %339 = vmatpush1.bf16.msra.mxu0 %v331
  %340 = vmatprep.subr.bf16.mxu0 0
  %341 = vmatpush1.bf16.msra.mxu0 0
  %342 = vmatprep.subr.bf16.mxu0 0
  %343 = vmatpush1.bf16.msra.mxu0 0
  %344 = vmatprep.subr.bf16.mxu0 0
  %345 = vmatpush1.bf16.msra.mxu0 0
  %346 = vmatprep.subr.bf16.mxu0 0
  %347 = vmatpush1.bf16.msra.mxu0 0
  %348 = vmatprep.subr.bf16.mxu0 0
  %349 = vmatpush1.bf16.msra.mxu0 0
  %350 = vmatprep.subr.bf16.mxu0 0
  %351 = vmatpush1.bf16.msra.mxu0 0
  %352 = vmatprep.subr.bf16.mxu0 0
  %353 = vmatpush1.bf16.msra.mxu0 0
  %354 = vmatprep.subr.bf16.mxu0 0
  %355 = vmatpush1.bf16.msra.mxu0 0
  %356 = vmatprep.subr.bf16.mxu0 0
  %357 = vmatpush1.bf16.msra.mxu0 0
  %358 = vmatprep.subr.bf16.mxu0 0
  %359 = vmatpush1.bf16.msra.mxu0 0
  %360 = vmatprep.subr.bf16.mxu0 0
  %361 = vmatpush1.bf16.msra.mxu0 0
  %362 = vmatprep.subr.bf16.mxu0 0
  %363 = vmatpush1.bf16.msra.mxu0 0
  %364 = vmatprep.subr.bf16.mxu0 0
  %365 = vmatpush1.bf16.msra.mxu0 0
  %366 = vmatprep.subr.bf16.mxu0 0
  %367 = vmatpush1.bf16.msra.mxu0 0
  %368 = vmatprep.mubr.bf16.mxu0 0
  %369 = vmatmul.mubr.bf16.gmra.mrb[0].mxu0 %v324
  %v370 = vpop.f32.mrb[0].mxu0
  %v371 = vadd.f32 0.0, %v370
  %v372 = vpop.f32.mrb[0].mxu0
  %v373 = vadd.f32 0.0, %v372
  %v374 = vpop.f32.mrb[0].mxu0
  %v375 = vpop.f32.mrb[0].mxu0
  %376 = vdwg.mxu0
  %v378 = vunpack.c.l.b16 %v299
  %v379 = vunpack.c.h.b16 %v299
  %v380 = vpack.c.b16 %v378, %v378
  %v381 = vpack.c.b16 %v379, %v379
  %vm382 = vcmask 64512
  %v384 = vsel %vm382, %v298, 0
  %v387 = vsel %vm326, %v380, 0
  %v390 = vsel %vm326, %v381, 0
  %392 = vmatprep.subr.bf16.mxu0 %v390
  %393 = vmatpush1.bf16.msra.mxu0 %v387
  %394 = vmatprep.subr.bf16.mxu0 0
  %395 = vmatpush1.bf16.msra.mxu0 0
  %396 = vmatprep.subr.bf16.mxu0 0
  %397 = vmatpush1.bf16.msra.mxu0 0
  %398 = vmatprep.subr.bf16.mxu0 0
  %399 = vmatpush1.bf16.msra.mxu0 0
  %400 = vmatprep.subr.bf16.mxu0 0
  %401 = vmatpush1.bf16.msra.mxu0 0
  %402 = vmatprep.subr.bf16.mxu0 0
  %403 = vmatpush1.bf16.msra.mxu0 0
  %404 = vmatprep.subr.bf16.mxu0 0
  %405 = vmatpush1.bf16.msra.mxu0 0
  %406 = vmatprep.subr.bf16.mxu0 0
  %407 = vmatpush1.bf16.msra.mxu0 0
  %408 = vmatprep.subr.bf16.mxu0 0
  %409 = vmatpush1.bf16.msra.mxu0 0
  %410 = vmatprep.subr.bf16.mxu0 0
  %411 = vmatpush1.bf16.msra.mxu0 0
  %412 = vmatprep.subr.bf16.mxu0 0
  %413 = vmatpush1.bf16.msra.mxu0 0
  %414 = vmatprep.subr.bf16.mxu0 0
  %415 = vmatpush1.bf16.msra.mxu0 0
  %416 = vmatprep.subr.bf16.mxu0 0
  %417 = vmatpush1.bf16.msra.mxu0 0
  %418 = vmatprep.subr.bf16.mxu0 0
  %419 = vmatpush1.bf16.msra.mxu0 0
  %420 = vmatprep.subr.bf16.mxu0 0
  %421 = vmatpush1.bf16.msra.mxu0 0
  %422 = vmatprep.subr.bf16.mxu0 0
  %423 = vmatpush1.bf16.msra.mxu0 0
  %424 = vmatprep.mubr.bf16.mxu0 0
  %425 = vmatmul.mubr.bf16.gmra.mrb[0].mxu0 %v384
  %v426 = vpop.f32.mrb[0].mxu0
  %v427 = vadd.f32 %v371, %v426
  %v428 = vpop.f32.mrb[0].mxu0
  %v429 = vadd.f32 %v373, %v428
  %v430 = vpop.f32.mrb[0].mxu0
  %v431 = vpop.f32.mrb[0].mxu0
  %432 = vdwg.mxu0
  %v433 = vld [vmem:[%s4] sm:$0xf]
  %v436 = vunpack.c.l.s4 1983009808
  %v437 = vunpack.c.0.s8 %v436
  %v438 = vlaneseq
  %v439 = vshrl.u32 %v438, 7
  %v440 = vsub.s32 %v437, %v439
  %v441 = vrot.slane %v433, %v440
  %v442 = vcombine.high %v441, %v441
  %v445 = vadd.f32 %v427, %v441
  %v446 = vadd.f32 %v429, %v442
  %v449 = vcombine.low %v445, %v446
  %v451 = vunpack.c.l.s4 1983009808
  %v452 = vunpack.c.0.s8 %v451
  %v453 = vlaneseq
  %v454 = vshrl.u32 %v453, 7
  %v455 = vsub.s32 %v452, %v454
  %v456 = vrot.slane %v449, %v455
  %458 = vst [vmem:[%s9] sm:$0xf] %v456
  %v459 = vpack.c.bf16 %v445, %v445
  %v460 = vpack.c.bf16 %v446, %v446
  %v461 = vld [vmem:[%s6] sm:$0xff]
  %v463 = vunpack.c.l.b16 %v461
  %v464 = vunpack.c.h.b16 %v461
  %v465 = vpack.c.b16 %v463, %v463
  %v466 = vpack.c.b16 %v464, %v464
  %469 = vmatprep.subr.bf16.mxu0 %v466
  %470 = vmatpush1.bf16.xpose.msra.mxu0 %v465
  %471 = vmatprep.subr.bf16.mxu0 0
  %472 = vmatpush1.bf16.xpose.msra.mxu0 0
  %473 = vmatprep.subr.bf16.mxu0 0
  %474 = vmatpush1.bf16.xpose.msra.mxu0 0
  %475 = vmatprep.subr.bf16.mxu0 0
  %476 = vmatpush1.bf16.xpose.msra.mxu0 0
  %477 = vmatprep.subr.bf16.mxu0 0
  %478 = vmatpush1.bf16.xpose.msra.mxu0 0
  %479 = vmatprep.subr.bf16.mxu0 0
  %480 = vmatpush1.bf16.xpose.msra.mxu0 0
  %481 = vmatprep.subr.bf16.mxu0 0
  %482 = vmatpush1.bf16.xpose.msra.mxu0 0
  %483 = vmatprep.subr.bf16.mxu0 0
  %484 = vmatpush1.bf16.xpose.msra.mxu0 0
  %485 = vmatprep.subr.bf16.mxu0 0
  %486 = vmatpush1.bf16.xpose.msra.mxu0 0
  %487 = vmatprep.subr.bf16.mxu0 0
  %488 = vmatpush1.bf16.xpose.msra.mxu0 0
  %489 = vmatprep.subr.bf16.mxu0 0
  %490 = vmatpush1.bf16.xpose.msra.mxu0 0
  %491 = vmatprep.subr.bf16.mxu0 0
  %492 = vmatpush1.bf16.xpose.msra.mxu0 0
  %493 = vmatprep.subr.bf16.mxu0 0
  %494 = vmatpush1.bf16.xpose.msra.mxu0 0
  %495 = vmatprep.subr.bf16.mxu0 0
  %496 = vmatpush1.bf16.xpose.msra.mxu0 0
  %497 = vmatprep.subr.bf16.mxu0 0
  %498 = vmatpush1.bf16.xpose.msra.mxu0 0
  %499 = vmatprep.subr.bf16.mxu0 0
  %500 = vmatpush1.bf16.xpose.msra.mxu0 0
  %501 = vmatprep.mubr.bf16.mxu0 %v460
  %502 = vmatmul.mubr.bf16.gmra.mrb[0].mxu0 %v459
  %v503 = vpop.f32.mrb[0].mxu0
  %v504 = vadd.f32 0.0, %v503
  %v505 = vpop.f32.mrb[0].mxu0
  %v506 = vpop.f32.mrb[0].mxu0
  %v507 = vpop.f32.mrb[0].mxu0
  %508 = vdwg.mxu0
  %v509 = vld [vmem:[%s6 + $0x8] sm:$0xf]
  %v511 = vsel %vm322, %v509, 0
  %513 = vmatprep.subr.bf16.mxu0 0
  %514 = vmatpush1.bf16.xpose.msra.mxu0 %v511
  %515 = vmatprep.subr.bf16.mxu0 0
  %516 = vmatpush1.bf16.xpose.msra.mxu0 0
  %517 = vmatprep.subr.bf16.mxu0 0
  %518 = vmatpush1.bf16.xpose.msra.mxu0 0
  %519 = vmatprep.subr.bf16.mxu0 0
  %520 = vmatpush1.bf16.xpose.msra.mxu0 0
  %521 = vmatprep.subr.bf16.mxu0 0
  %522 = vmatpush1.bf16.xpose.msra.mxu0 0
  %523 = vmatprep.subr.bf16.mxu0 0
  %524 = vmatpush1.bf16.xpose.msra.mxu0 0
  %525 = vmatprep.subr.bf16.mxu0 0
  %526 = vmatpush1.bf16.xpose.msra.mxu0 0
  %527 = vmatprep.subr.bf16.mxu0 0
  %528 = vmatpush1.bf16.xpose.msra.mxu0 0
  %529 = vmatprep.subr.bf16.mxu0 0
  %530 = vmatpush1.bf16.xpose.msra.mxu0 0
  %531 = vmatprep.subr.bf16.mxu0 0
  %532 = vmatpush1.bf16.xpose.msra.mxu0 0
  %533 = vmatprep.subr.bf16.mxu0 0
  %534 = vmatpush1.bf16.xpose.msra.mxu0 0
  %535 = vmatprep.subr.bf16.mxu0 0
  %536 = vmatpush1.bf16.xpose.msra.mxu0 0
  %537 = vmatprep.subr.bf16.mxu0 0
  %538 = vmatpush1.bf16.xpose.msra.mxu0 0
  %539 = vmatprep.subr.bf16.mxu0 0
  %540 = vmatpush1.bf16.xpose.msra.mxu0 0
  %541 = vmatprep.subr.bf16.mxu0 0
  %542 = vmatpush1.bf16.xpose.msra.mxu0 0
  %543 = vmatprep.subr.bf16.mxu0 0
  %544 = vmatpush1.bf16.xpose.msra.mxu0 0
  %545 = vmatprep.mubr.bf16.mxu0 0
  %546 = vmatmul.mubr.bf16.gmra.mrb[0].mxu0 %v324
  %v547 = vpop.f32.mrb[0].mxu0
  %v548 = vadd.f32 0.0, %v547
  %v549 = vpop.f32.mrb[0].mxu0
  %v550 = vpop.f32.mrb[0].mxu0
  %v551 = vpop.f32.mrb[0].mxu0
  %552 = vdwg.mxu0
  %v553 = vpack.c.bf16 %v504, %v504
  %v554 = vld [vmem:[%s7] sm:$0xff]
  %v555 = vld [vmem:[%s7 + $0x8] sm:$0xff]
  %v556 = vld [vmem:[%s7 + $0x10] sm:$0xff]
  %v560 = vunpack.c.l.b16 %v554
  %v561 = vunpack.c.h.b16 %v554
  %v562 = vunpack.c.l.b16 %v555
  %v563 = vunpack.c.h.b16 %v555
  %v564 = vunpack.c.l.b16 %v556
  %v565 = vunpack.c.h.b16 %v556
  %v566 = vpack.c.b16 %v560, %v560
  %v567 = vpack.c.b16 %v561, %v561
  %v568 = vpack.c.b16 %v562, %v562
  %v569 = vpack.c.b16 %v563, %v563
  %v570 = vpack.c.b16 %v564, %v564
  %v571 = vpack.c.b16 %v565, %v565
  %v573 = vsel %vm382, %v553, 0
  %v576 = vsel %vm326, %v566, 0
  %v579 = vsel %vm326, %v567, 0
  %v582 = vsel %vm326, %v568, 0
  %v585 = vsel %vm326, %v569, 0
  %v588 = vsel %vm326, %v570, 0
  %v591 = vsel %vm326, %v571, 0
  %593 = vmatprep.subr.bf16.mxu0 %v579
  %594 = vmatpush1.bf16.msra.mxu0 %v576
  %595 = vmatprep.subr.bf16.mxu0 0
  %596 = vmatpush1.bf16.msra.mxu0 0
  %597 = vmatprep.subr.bf16.mxu0 0
  %598 = vmatpush1.bf16.msra.mxu0 0
  %599 = vmatprep.subr.bf16.mxu0 0
  %600 = vmatpush1.bf16.msra.mxu0 0
  %601 = vmatprep.subr.bf16.mxu0 0
  %602 = vmatpush1.bf16.msra.mxu0 0
  %603 = vmatprep.subr.bf16.mxu0 0
  %604 = vmatpush1.bf16.msra.mxu0 0
  %605 = vmatprep.subr.bf16.mxu0 0
  %606 = vmatpush1.bf16.msra.mxu0 0
  %607 = vmatprep.subr.bf16.mxu0 0
  %608 = vmatpush1.bf16.msra.mxu0 0
  %609 = vmatprep.subr.bf16.mxu0 0
  %610 = vmatpush1.bf16.msra.mxu0 0
  %611 = vmatprep.subr.bf16.mxu0 0
  %612 = vmatpush1.bf16.msra.mxu0 0
  %613 = vmatprep.subr.bf16.mxu0 0
  %614 = vmatpush1.bf16.msra.mxu0 0
  %615 = vmatprep.subr.bf16.mxu0 0
  %616 = vmatpush1.bf16.msra.mxu0 0
  %617 = vmatprep.subr.bf16.mxu0 0
  %618 = vmatpush1.bf16.msra.mxu0 0
  %619 = vmatprep.subr.bf16.mxu0 0
  %620 = vmatpush1.bf16.msra.mxu0 0
  %621 = vmatprep.subr.bf16.mxu0 0
  %622 = vmatpush1.bf16.msra.mxu0 0
  %623 = vmatprep.subr.bf16.mxu0 0
  %624 = vmatpush1.bf16.msra.mxu0 0
  %625 = vmatprep.mubr.bf16.mxu0 0
  %626 = vmatmul.mubr.bf16.gmra.mrb[0].mxu0 %v573
  %v627 = vpop.f32.mrb[0].mxu0
  %v628 = vadd.f32 0.0, %v627
  %v629 = vpop.f32.mrb[0].mxu0
  %v630 = vadd.f32 0.0, %v629
  %v631 = vpop.f32.mrb[0].mxu0
  %v632 = vpop.f32.mrb[0].mxu0
  %633 = vdwg.mxu0
  %634 = vmatprep.subr.bf16.mxu0 %v585
  %635 = vmatpush1.bf16.msra.mxu0 %v582
  %636 = vmatprep.subr.bf16.mxu0 0
  %637 = vmatpush1.bf16.msra.mxu0 0
  %638 = vmatprep.subr.bf16.mxu0 0
  %639 = vmatpush1.bf16.msra.mxu0 0
  %640 = vmatprep.subr.bf16.mxu0 0
  %641 = vmatpush1.bf16.msra.mxu0 0
  %642 = vmatprep.subr.bf16.mxu0 0
  %643 = vmatpush1.bf16.msra.mxu0 0
  %644 = vmatprep.subr.bf16.mxu0 0
  %645 = vmatpush1.bf16.msra.mxu0 0
  %646 = vmatprep.subr.bf16.mxu0 0
  %647 = vmatpush1.bf16.msra.mxu0 0
  %648 = vmatprep.subr.bf16.mxu0 0
  %649 = vmatpush1.bf16.msra.mxu0 0
  %650 = vmatprep.subr.bf16.mxu0 0
  %651 = vmatpush1.bf16.msra.mxu0 0
  %652 = vmatprep.subr.bf16.mxu0 0
  %653 = vmatpush1.bf16.msra.mxu0 0
  %654 = vmatprep.subr.bf16.mxu0 0
  %655 = vmatpush1.bf16.msra.mxu0 0
  %656 = vmatprep.subr.bf16.mxu0 0
  %657 = vmatpush1.bf16.msra.mxu0 0
  %658 = vmatprep.subr.bf16.mxu0 0
  %659 = vmatpush1.bf16.msra.mxu0 0
  %660 = vmatprep.subr.bf16.mxu0 0
  %661 = vmatpush1.bf16.msra.mxu0 0
  %662 = vmatprep.subr.bf16.mxu0 0
  %663 = vmatpush1.bf16.msra.mxu0 0
  %664 = vmatprep.subr.bf16.mxu0 0
  %665 = vmatpush1.bf16.msra.mxu0 0
  %666 = vmatprep.mubr.bf16.mxu0 0
  %667 = vmatmul.mubr.bf16.gmra.mrb[0].mxu0 %v573
  %v668 = vpop.f32.mrb[0].mxu0
  %v669 = vadd.f32 0.0, %v668
  %v670 = vpop.f32.mrb[0].mxu0
  %v671 = vadd.f32 0.0, %v670
  %v672 = vpop.f32.mrb[0].mxu0
  %v673 = vpop.f32.mrb[0].mxu0
  %674 = vdwg.mxu0
  %675 = vmatprep.subr.bf16.mxu0 %v591
  %676 = vmatpush1.bf16.msra.mxu0 %v588
  %677 = vmatprep.subr.bf16.mxu0 0
  %678 = vmatpush1.bf16.msra.mxu0 0
  %679 = vmatprep.subr.bf16.mxu0 0
  %680 = vmatpush1.bf16.msra.mxu0 0
  %681 = vmatprep.subr.bf16.mxu0 0
  %682 = vmatpush1.bf16.msra.mxu0 0
  %683 = vmatprep.subr.bf16.mxu0 0
  %684 = vmatpush1.bf16.msra.mxu0 0
  %685 = vmatprep.subr.bf16.mxu0 0
  %686 = vmatpush1.bf16.msra.mxu0 0
  %687 = vmatprep.subr.bf16.mxu0 0
  %688 = vmatpush1.bf16.msra.mxu0 0
  %689 = vmatprep.subr.bf16.mxu0 0
  %690 = vmatpush1.bf16.msra.mxu0 0
  %691 = vmatprep.subr.bf16.mxu0 0
  %692 = vmatpush1.bf16.msra.mxu0 0
  %693 = vmatprep.subr.bf16.mxu0 0
  %694 = vmatpush1.bf16.msra.mxu0 0
  %695 = vmatprep.subr.bf16.mxu0 0
  %696 = vmatpush1.bf16.msra.mxu0 0
  %697 = vmatprep.subr.bf16.mxu0 0
  %698 = vmatpush1.bf16.msra.mxu0 0
  %699 = vmatprep.subr.bf16.mxu0 0
  %700 = vmatpush1.bf16.msra.mxu0 0
  %701 = vmatprep.subr.bf16.mxu0 0
  %702 = vmatpush1.bf16.msra.mxu0 0
  %703 = vmatprep.subr.bf16.mxu0 0
  %704 = vmatpush1.bf16.msra.mxu0 0
  %705 = vmatprep.subr.bf16.mxu0 0
  %706 = vmatpush1.bf16.msra.mxu0 0
  %707 = vmatprep.mubr.bf16.mxu0 0
  %708 = vmatmul.mubr.bf16.gmra.mrb[0].mxu0 %v573
  %v709 = vpop.f32.mrb[0].mxu0
  %v710 = vadd.f32 0.0, %v709
  %v711 = vpop.f32.mrb[0].mxu0
  %v712 = vadd.f32 0.0, %v711
  %v713 = vpop.f32.mrb[0].mxu0
  %v714 = vpop.f32.mrb[0].mxu0
  %715 = vdwg.mxu0
  %v716 = vpack.c.bf16 %v548, %v548
  %v718 = vsel %vm382, %v716, 0
  %720 = vmatprep.subr.bf16.mxu0 %v579
  %721 = vmatpush1.bf16.msra.mxu0 %v576
  %722 = vmatprep.subr.bf16.mxu0 0
  %723 = vmatpush1.bf16.msra.mxu0 0
  %724 = vmatprep.subr.bf16.mxu0 0
  %725 = vmatpush1.bf16.msra.mxu0 0
  %726 = vmatprep.subr.bf16.mxu0 0
  %727 = vmatpush1.bf16.msra.mxu0 0
  %728 = vmatprep.subr.bf16.mxu0 0
  %729 = vmatpush1.bf16.msra.mxu0 0
  %730 = vmatprep.subr.bf16.mxu0 0
  %731 = vmatpush1.bf16.msra.mxu0 0
  %732 = vmatprep.subr.bf16.mxu0 0
  %733 = vmatpush1.bf16.msra.mxu0 0
  %734 = vmatprep.subr.bf16.mxu0 0
  %735 = vmatpush1.bf16.msra.mxu0 0
  %736 = vmatprep.subr.bf16.mxu0 0
  %737 = vmatpush1.bf16.msra.mxu0 0
  %738 = vmatprep.subr.bf16.mxu0 0
  %739 = vmatpush1.bf16.msra.mxu0 0
  %740 = vmatprep.subr.bf16.mxu0 0
  %741 = vmatpush1.bf16.msra.mxu0 0
  %742 = vmatprep.subr.bf16.mxu0 0
  %743 = vmatpush1.bf16.msra.mxu0 0
  %744 = vmatprep.subr.bf16.mxu0 0
  %745 = vmatpush1.bf16.msra.mxu0 0
  %746 = vmatprep.subr.bf16.mxu0 0
  %747 = vmatpush1.bf16.msra.mxu0 0
  %748 = vmatprep.subr.bf16.mxu0 0
  %749 = vmatpush1.bf16.msra.mxu0 0
  %750 = vmatprep.subr.bf16.mxu0 0
  %751 = vmatpush1.bf16.msra.mxu0 0
  %752 = vmatprep.mubr.bf16.mxu0 0
  %753 = vmatmul.mubr.bf16.gmra.mrb[0].mxu0 %v718
  %v754 = vpop.f32.mrb[0].mxu0
  %v755 = vadd.f32 0.0, %v754
  %v756 = vpop.f32.mrb[0].mxu0
  %v757 = vadd.f32 0.0, %v756
  %v758 = vpop.f32.mrb[0].mxu0
  %v759 = vpop.f32.mrb[0].mxu0
  %760 = vdwg.mxu0
  %761 = vmatprep.subr.bf16.mxu0 %v585
  %762 = vmatpush1.bf16.msra.mxu0 %v582
  %763 = vmatprep.subr.bf16.mxu0 0
  %764 = vmatpush1.bf16.msra.mxu0 0
  %765 = vmatprep.subr.bf16.mxu0 0
  %766 = vmatpush1.bf16.msra.mxu0 0
  %767 = vmatprep.subr.bf16.mxu0 0
  %768 = vmatpush1.bf16.msra.mxu0 0
  %769 = vmatprep.subr.bf16.mxu0 0
  %770 = vmatpush1.bf16.msra.mxu0 0
  %771 = vmatprep.subr.bf16.mxu0 0
  %772 = vmatpush1.bf16.msra.mxu0 0
  %773 = vmatprep.subr.bf16.mxu0 0
  %774 = vmatpush1.bf16.msra.mxu0 0
  %775 = vmatprep.subr.bf16.mxu0 0
  %776 = vmatpush1.bf16.msra.mxu0 0
  %777 = vmatprep.subr.bf16.mxu0 0
  %778 = vmatpush1.bf16.msra.mxu0 0
  %779 = vmatprep.subr.bf16.mxu0 0
  %780 = vmatpush1.bf16.msra.mxu0 0
  %781 = vmatprep.subr.bf16.mxu0 0
  %782 = vmatpush1.bf16.msra.mxu0 0
  %783 = vmatprep.subr.bf16.mxu0 0
  %784 = vmatpush1.bf16.msra.mxu0 0
  %785 = vmatprep.subr.bf16.mxu0 0
  %786 = vmatpush1.bf16.msra.mxu0 0
  %787 = vmatprep.subr.bf16.mxu0 0
  %788 = vmatpush1.bf16.msra.mxu0 0
  %789 = vmatprep.subr.bf16.mxu0 0
  %790 = vmatpush1.bf16.msra.mxu0 0
  %791 = vmatprep.subr.bf16.mxu0 0
  %792 = vmatpush1.bf16.msra.mxu0 0
  %793 = vmatprep.mubr.bf16.mxu0 0
  %794 = vmatmul.mubr.bf16.gmra.mrb[0].mxu0 %v718
  %v795 = vpop.f32.mrb[0].mxu0
  %v796 = vadd.f32 0.0, %v795
  %v797 = vpop.f32.mrb[0].mxu0
  %v798 = vadd.f32 0.0, %v797
  %v799 = vpop.f32.mrb[0].mxu0
  %v800 = vpop.f32.mrb[0].mxu0
  %801 = vdwg.mxu0
  %802 = vmatprep.subr.bf16.mxu0 %v591
  %803 = vmatpush1.bf16.msra.mxu0 %v588
  %804 = vmatprep.subr.bf16.mxu0 0
  %805 = vmatpush1.bf16.msra.mxu0 0
  %806 = vmatprep.subr.bf16.mxu0 0
  %807 = vmatpush1.bf16.msra.mxu0 0
  %808 = vmatprep.subr.bf16.mxu0 0
  %809 = vmatpush1.bf16.msra.mxu0 0
  %810 = vmatprep.subr.bf16.mxu0 0
  %811 = vmatpush1.bf16.msra.mxu0 0
  %812 = vmatprep.subr.bf16.mxu0 0
  %813 = vmatpush1.bf16.msra.mxu0 0
  %814 = vmatprep.subr.bf16.mxu0 0
  %815 = vmatpush1.bf16.msra.mxu0 0
  %816 = vmatprep.subr.bf16.mxu0 0
  %817 = vmatpush1.bf16.msra.mxu0 0
  %818 = vmatprep.subr.bf16.mxu0 0
  %819 = vmatpush1.bf16.msra.mxu0 0
  %820 = vmatprep.subr.bf16.mxu0 0
  %821 = vmatpush1.bf16.msra.mxu0 0
  %822 = vmatprep.subr.bf16.mxu0 0
  %823 = vmatpush1.bf16.msra.mxu0 0
  %824 = vmatprep.subr.bf16.mxu0 0
  %825 = vmatpush1.bf16.msra.mxu0 0
  %826 = vmatprep.subr.bf16.mxu0 0
  %827 = vmatpush1.bf16.msra.mxu0 0
  %828 = vmatprep.subr.bf16.mxu0 0
  %829 = vmatpush1.bf16.msra.mxu0 0
  %830 = vmatprep.subr.bf16.mxu0 0
  %831 = vmatpush1.bf16.msra.mxu0 0
  %832 = vmatprep.subr.bf16.mxu0 0
  %833 = vmatpush1.bf16.msra.mxu0 0
  %834 = vmatprep.mubr.bf16.mxu0 0
  %835 = vmatmul.mubr.bf16.gmra.mrb[0].mxu0 %v718
  %v836 = vpop.f32.mrb[0].mxu0
  %v837 = vadd.f32 0.0, %v836
  %v838 = vpop.f32.mrb[0].mxu0
  %v839 = vadd.f32 0.0, %v838
  %v840 = vpop.f32.mrb[0].mxu0
  %v841 = vpop.f32.mrb[0].mxu0
  %842 = vdwg.mxu0
  %v843 = vld [vmem:[%s8] sm:$0x3f]
  %v844 = vadd.f32 %v628, %v755
  %v845 = vadd.f32 %v630, %v757
  %v846 = vadd.f32 %v669, %v796
  %v847 = vadd.f32 %v671, %v798
  %v848 = vadd.f32 %v710, %v837
  %v849 = vadd.f32 %v712, %v839
  %v851 = vlaneseq
  %v852 = vshrl.u32 %v851, 7
  %v853 = vsub.s32 0, %v852
  %v854 = vrot.slane %v843, %v853
  %v855 = vlaneseq
  %v856 = vshrl.u32 %v855, 7
  %v857 = vsub.s32 1, %v856
  %v858 = vrot.slane %v843, %v857
  %v859 = vlaneseq
  %v860 = vshrl.u32 %v859, 7
  %v861 = vsub.s32 2, %v860
  %v862 = vrot.slane %v843, %v861
  %v863 = vlaneseq
  %v864 = vshrl.u32 %v863, 7
  %v865 = vsub.s32 3, %v864
  %v866 = vrot.slane %v843, %v865
  %v867 = vlaneseq
  %v868 = vshrl.u32 %v867, 7
  %v869 = vsub.s32 4, %v868
  %v870 = vrot.slane %v843, %v869
  %v871 = vlaneseq
  %v872 = vshrl.u32 %v871, 7
  %v873 = vsub.s32 5, %v872
  %v874 = vrot.slane %v843, %v873
  %v881 = vadd.f32 %v844, %v854
  %v882 = vadd.f32 %v845, %v858
  %v883 = vadd.f32 %v846, %v862
  %v884 = vadd.f32 %v847, %v866
  %v885 = vadd.f32 %v848, %v870
  %v886 = vadd.f32 %v849, %v874
  %v887 = vtanh.pop %v881
  %v888 = vtanh.pop %v882
  %v889 = vtanh.pop %v883
  %v890 = vtanh.pop %v884
  %v891 = vtanh.pop %v885
  %v892 = vtanh.pop %v886
  %v899 = vcombine.low %v887, %v888
  %v900 = vcombine.low %v889, %v890
  %v901 = vcombine.low %v891, %v892
  %905 = vst [vmem:[%s10] sm:$0x33] %v899
  %906 = vst [vmem:[%s10 + $0x8] sm:$0x33] %v900
  %907 = vst [vmem:[%s10 + $0x10] sm:$0x33] %v901
  %v914 = vrot.slane %v755, 2
  %v915 = vrot.slane %v757, 2
  %v916 = vrot.slane %v796, 2
  %v917 = vrot.slane %v798, 2
  %v918 = vrot.slane %v837, 2
  %v919 = vrot.slane %v839, 2
  %v926 = vadd.f32 %v628, %v914
  %v927 = vadd.f32 %v630, %v915
  %v928 = vadd.f32 %v669, %v916
  %v929 = vadd.f32 %v671, %v917
  %v930 = vadd.f32 %v710, %v918
  %v931 = vadd.f32 %v712, %v919
  %v932 = vadd.f32 %v926, %v854
  %v933 = vadd.f32 %v927, %v858
  %v934 = vadd.f32 %v928, %v862
  %v935 = vadd.f32 %v929, %v866
  %v936 = vadd.f32 %v930, %v870
  %v937 = vadd.f32 %v931, %v874
  %v938 = vtanh.pop %v932
  %v939 = vtanh.pop %v933
  %v940 = vtanh.pop %v934
  %v941 = vtanh.pop %v935
  %v942 = vtanh.pop %v936
  %v943 = vtanh.pop %v937
  %v950 = vcombine.low %v938, %v939
  %v951 = vcombine.low %v940, %v941
  %v952 = vcombine.low %v942, %v943
  %v953 = vrot.slane %v950, 6
  %v954 = vrot.slane %v951, 6
  %v955 = vrot.slane %v952, 6
  %959 = vst [vmem:[%s10] sm:$0xcc] %v953
  %960 = vst [vmem:[%s10 + $0x8] sm:$0xcc] %v954
  %961 = vst [vmem:[%s10 + $0x10] sm:$0xcc] %v955
  // Predicated region
  $region38: #{psp_forward.1} parent=0 // pred_check
    _
  $region39: #{psp_forward.1} parent=0 // pred_check_branch
    %963 = sbr.rel (0) target = $region41
  $region40: #{psp_forward.1} parent=0 // pred_region
    _
  $region41: #{psp_forward.1} parent=0 // pred_fallthru
    _
  // Predicated region
  $region42: #{psp_forward.1} parent=0 // pred_check
    _
  $region43: #{psp_forward.1} parent=0 // pred_check_branch
    %965 = sbr.rel (0) target = $region45
  $region44: #{psp_forward.1} parent=0 // pred_region
    _
  $region45: #{psp_forward.1} parent=0 // pred_fallthru
    _
  // Predicated region
  $region46: #{psp_forward.1} parent=0 // pred_check
    _
  $region47: #{psp_forward.1} parent=0 // pred_check_branch
    %967 = sbr.rel (0) target = $region49
  $region48: #{psp_forward.1} parent=0 // pred_region
    _
  $region49: #{psp_forward.1} parent=0 // pred_fallthru
    _
  // Predicated region
  $region50: #{psp_forward.1} parent=0 // pred_check
    _
  $region51: #{psp_forward.1} parent=0 // pred_check_branch
    %969 = sbr.rel (0) target = $region53
  $region52: #{psp_forward.1} parent=0 // pred_region
    _
  $region53: #{psp_forward.1} parent=0 // pred_fallthru
    _

</llo_original>
